<compile_context>
chip_gen: v7x
topology: tpu7x:2x2x1
jax: 0.10.0
libtpu: 0.0.40
codegen_flags: <defaults>
</compile_context>

<pallas_src>
import functools

import jax
import jax.numpy as jnp
from jax.experimental import pallas as pl
from jax.experimental.pallas import tpu as pltpu


_LANE = 128
_PAD_LOGIT = -1e4  # sigmoid(-1e4) == 0.0; pad columns are masked to -inf anyway


def _postprocess_kernel(logits_ref, conf_ref, exist_ref, *, thresh, window, n_valid):
    """Sigmoid + thresholded local-maximum suppression (max_pool1d w/ indices).

    torch.nn.functional.max_pool1d(return_indices=True) returns the FIRST index
    of the window maximum (ties broken towards lower index, implicit -inf
    padding), so position i is a local maximum iff
        conf[i] >  conf[i-d]   for d = 1..pad
        conf[i] >= conf[i+d]   for d = 1..pad
    The lane axis is padded to a multiple of 128 in the wrapper; columns
    >= n_valid (and roll wrap-around) are masked to -inf before comparison.
    """
    conf = jax.nn.sigmoid(logits_ref[...].astype(jnp.float32))
    rows, n = conf.shape
    pad = (window - 1) // 2
    neg_inf = jnp.float32(-jnp.inf)
    idx = jax.lax.broadcasted_iota(jnp.int32, (rows, n), 1)

    def neighbor(x, dist, direction):
        # y[:, i] = x[:, i + direction*dist] if that position is inside the REAL
        # (unpadded) row, else -inf.  Each row is one batch element, so the
        # window never crosses rows (rolls act only along the lane axis).
        # pltpu.roll needs a non-negative shift: right neighbours use n - dist.
        shift = dist if direction < 0 else n - dist
        y = pltpu.roll(x, shift=shift, axis=1)
        valid = (idx >= dist) if direction < 0 else (idx < n_valid - dist)
        return jnp.where(valid, y, neg_inf)

    def running_max(direction):
        # max over neighbours at distances 1..pad via log2 doubling
        # (3 rolls + 2 maxima per side for pad=4 instead of 4 rolls + 4 compares).
        m = neighbor(conf, 1, direction)
        k = 1
        while k < pad:
            s = min(k, pad - k)
            m = jnp.maximum(m, neighbor(m, s, direction))
            k += s
        return m

    if pad > 0:
        is_max = (conf > running_max(-1)) & (conf >= running_max(+1))
        exist = (conf > jnp.float32(thresh)) & is_max
    else:
        exist = conf > jnp.float32(thresh)

    conf_ref[...] = conf
    exist_ref[...] = exist.astype(jnp.int8)


def _choose_block_rows(batch, padded_cols):
    """Rows per grid step.

    ~2 MiB of (f32-equivalent) input per block — this kernel is pure HBM
    bandwidth, and ~1-2 MiB tiles are needed to amortize the ~0.35 us per-step
    overhead.  Rounded for tile friendliness (32 for the int8 exist output,
    8 for f32), capped so large batches keep >= 2 grid steps (megacore / v7x),
    and never emitting a sublane count that is neither a multiple of 8 nor the
    full batch.
    """
    bytes_per_row = padded_cols * 4
    tb = max(1, (2 * 1024 * 1024) // bytes_per_row)
    if batch >= 64:
        # leave at least two grid steps so ("parallel",) can use both TCs on v7x
        tb = min(tb, max(32, (batch // 2) // 32 * 32))
    if tb >= batch:
        return batch
    if tb >= 32:
        return (tb // 32) * 32      # int8 exist native (32,128) tile
    if tb >= 8:
        return (tb // 8) * 8        # f32 (8,128) tile
    return min(batch, 8)            # huge-N fallback: keep BlockSpec legality


class BezierBaseNet:
    """JAX/Pallas port of the tensorized parts of BezierBaseNet.inference."""

    def __init__(self, thresh=0.5, local_maximum_window_size=9):
        self.thresh = float(thresh)
        self.local_maximum_window_size = int(local_maximum_window_size)
        if self.local_maximum_window_size > 0 and self.local_maximum_window_size % 2 == 0:
            # padding=(w-1)//2 only reproduces torch's max_pool1d window for odd w
            raise ValueError("local_maximum_window_size must be odd (or <= 0)")

    def postprocess(self, logits):
        """logits: (B, N), any float dtype (cast to f32 in-kernel).

        Returns (existence_conf (B,N) f32, existence (B,N) int8 0/1 mask).
        The mask is left as int8 on purpose (nonzero == True, minimal HBM
        writeback); convert with `.astype(bool)` only if a bool is needed.
        """
        B, N = logits.shape
        window = (
            self.local_maximum_window_size
            if self.local_maximum_window_size > 0
            else 1
        )

        # Pad the query axis to a multiple of 128 so every block is lane-dense:
        # clean (8,128) vregs, no masked partial stores, rolls never need a
        # slice/concat fallback.  Fill is effectively -inf for the comparisons
        # (and masked against the real N inside the kernel anyway).
        n_pad = ((N + _LANE - 1) // _LANE) * _LANE
        x = logits
        if n_pad != N:
            x = jnp.pad(logits, ((0, 0), (0, n_pad - N)), constant_values=_PAD_LOGIT)

        tb = _choose_block_rows(B, n_pad)
        grid = (pl.cdiv(B, tb),)

        kernel = functools.partial(
            _postprocess_kernel, thresh=self.thresh, window=window, n_valid=N
        )
        conf, exist = pl.pallas_call(
            kernel,
            out_shape=(
                jax.ShapeDtypeStruct((B, n_pad), jnp.float32),
                jax.ShapeDtypeStruct((B, n_pad), jnp.int8),
            ),
            grid_spec=pltpu.PrefetchScalarGridSpec(
                num_scalar_prefetch=0,
                grid=grid,
                in_specs=[pl.BlockSpec((tb, n_pad), lambda i: (i, 0))],
                out_specs=(
                    pl.BlockSpec((tb, n_pad), lambda i: (i, 0)),
                    pl.BlockSpec((tb, n_pad), lambda i: (i, 0)),
                ),
            ),
            compiler_params=pltpu.CompilerParams(
                dimension_semantics=("parallel",),
                # double-buffered in/conf/exist + roll-chain temporaries at a
                # ~2 MiB input block ≈ 20 MiB: above v5e's 16 MiB default scoped
                # limit, comfortably below v7x's 64 MiB physical VMEM.
                vmem_limit_bytes=32 * 1024 * 1024,
            ),
        )(x)  # native dtype in; cast to f32 happens inside the kernel

        if n_pad != N:
            conf = conf[:, :N]
            exist = exist[:, :N]
        return conf, exist

    def inference(self, outputs):
        """Tensor (device) part of BezierBaseNet.inference.

        outputs: dict with 'logits' (B, N) and 'curves' (B, N, 4, 2).
        Returns (existence_conf f32, existence int8 0/1 mask, control_points).
        """
        conf, exist = self.postprocess(outputs["logits"])
        # TODO(synk): bezier_to_coordinates / lane_pruning are data-dependent
        # host-side Python/numpy loops (list building, per-lane argmin) — not ported.
        return conf, exist, outputs["curves"]


def _reference_postprocess(logits, thresh, window):
    """Pure-JAX reference mirroring torch.sigmoid + max_pool1d(return_indices)."""
    conf = jax.nn.sigmoid(logits.astype(jnp.float32))
    B, N = conf.shape
    pad = (window - 1) // 2
    idx = jnp.arange(N)[None, :]
    is_max = jnp.ones((B, N), dtype=jnp.bool_)
    for d in range(1, pad + 1):
        left = jnp.where(idx >= d, jnp.roll(conf, d, axis=1), -jnp.inf)
        right = jnp.where(idx < N - d, jnp.roll(conf, -d, axis=1), -jnp.inf)
        is_max = is_max & (conf > left) & (conf >= right)
    exist = (conf > thresh) & is_max
    return conf, exist


if __name__ == "__main__":
    key = jax.random.PRNGKey(0)
    k_logits, k_curves, k_logits2 = jax.random.split(key, 3)

    net = BezierBaseNet(thresh=0.5, local_maximum_window_size=9)

    # Case 1: lane-aligned number of curve queries.
    B, N = 2, 128
    logits = jax.random.normal(k_logits, (B, N), dtype=jnp.float32) * 2.0
    curves = jax.random.uniform(k_curves, (B, N, 4, 2), dtype=jnp.float32)
    outputs = {"logits": logits, "curves": curves}

    conf, exist, cps = net.inference(outputs)
    jax.block_until_ready((conf, exist, cps))

    ref_conf, ref_exist = _reference_postprocess(
        logits, net.thresh, net.local_maximum_window_size
    )
    assert jnp.allclose(conf, ref_conf, atol=1e-6), "confidence mismatch"
    assert jnp.array_equal(exist.astype(jnp.bool_), ref_exist), "existence mask mismatch"

    # Case 2: non-lane-aligned N exercises the wrapper-side padding path.
    B2, N2 = 2, 200
    logits2 = jax.random.normal(k_logits2, (B2, N2), dtype=jnp.float32) * 2.0
    conf2, exist2 = net.postprocess(logits2)
    jax.block_until_ready((conf2, exist2))
    ref_conf2, ref_exist2 = _reference_postprocess(
        logits2, net.thresh, net.local_maximum_window_size
    )
    assert conf2.shape == (B2, N2) and exist2.shape == (B2, N2)
    assert jnp.allclose(conf2, ref_conf2, atol=1e-6), "confidence mismatch (padded N)"
    assert jnp.array_equal(exist2.astype(jnp.bool_), ref_exist2), "existence mismatch (padded N)"

    print("KERNEL_OK")
</pallas_src>

<mosaic_0001>
module attributes {stable_mosaic.version = 11 : i64} {
  func.func @_postprocess_kernel(%arg0: i32, %arg1: memref<2x128xf32, #tpu.memory_space<vmem>>, %arg2: memref<2x128xf32, #tpu.memory_space<vmem>>, %arg3: memref<2x128xi8, #tpu.memory_space<vmem>>) attributes {dimension_semantics = [#tpu.dimension_semantics<parallel>], iteration_bounds = array<i64: 1>, scalar_prefetch = 0 : i64, scratch_operands = 0 : i64, tpu.core_type = #tpu.core_type<tc>, window_params = [{transform_indices = @transform_0, window_bounds = array<i64: 2, 128>}, {transform_indices = @transform_1, window_bounds = array<i64: 2, 128>}, {transform_indices = @transform_2, window_bounds = array<i64: 2, 128>}]} {
    %c0 = arith.constant 0 : index
    %c0_0 = arith.constant 0 : index
    %0 = vector.load %arg1[%c0, %c0_0] : memref<2x128xf32, #tpu.memory_space<vmem>>, vector<2x128xf32>
    %1 = arith.negf %0 : vector<2x128xf32>
    %2 = math.exp %1 : vector<2x128xf32>
    %cst = arith.constant 1.000000e+00 : f32
    %3 = vector.broadcast %cst : f32 to vector<2x128xf32>
    %4 = arith.addf %3, %2 : vector<2x128xf32>
    %5 = arith.divf %3, %4 : vector<2x128xf32>
    %6 = tpu.iota {dimensions = array<i32: 1>} : vector<2x128xi32>
    %c1_i32 = arith.constant 1 : i32
    %7 = tpu.dynamic_rotate %5 by %c1_i32 dim 1 : vector<2x128xf32>, i32 -> vector<2x128xf32>
    %c1_i32_1 = arith.constant 1 : i32
    %8 = vector.broadcast %c1_i32_1 : i32 to vector<2x128xi32>
    %9 = arith.cmpi sge, %6, %8 : vector<2x128xi32>
    %cst_2 = arith.constant 0xFF800000 : f32
    %10 = vector.broadcast %cst_2 : f32 to vector<2x128xf32>
    %11 = arith.select %9, %7, %10 : vector<2x128xi1>, vector<2x128xf32>
    %c1_i32_3 = arith.constant 1 : i32
    %12 = tpu.dynamic_rotate %11 by %c1_i32_3 dim 1 : vector<2x128xf32>, i32 -> vector<2x128xf32>
    %c1_i32_4 = arith.constant 1 : i32
    %13 = vector.broadcast %c1_i32_4 : i32 to vector<2x128xi32>
    %14 = arith.cmpi sge, %6, %13 : vector<2x128xi32>
    %cst_5 = arith.constant 0xFF800000 : f32
    %15 = vector.broadcast %cst_5 : f32 to vector<2x128xf32>
    %16 = arith.select %14, %12, %15 : vector<2x128xi1>, vector<2x128xf32>
    %17 = arith.maximumf %11, %16 : vector<2x128xf32>
    %c2_i32 = arith.constant 2 : i32
    %18 = tpu.dynamic_rotate %17 by %c2_i32 dim 1 : vector<2x128xf32>, i32 -> vector<2x128xf32>
    %c2_i32_6 = arith.constant 2 : i32
    %19 = vector.broadcast %c2_i32_6 : i32 to vector<2x128xi32>
    %20 = arith.cmpi sge, %6, %19 : vector<2x128xi32>
    %cst_7 = arith.constant 0xFF800000 : f32
    %21 = vector.broadcast %cst_7 : f32 to vector<2x128xf32>
    %22 = arith.select %20, %18, %21 : vector<2x128xi1>, vector<2x128xf32>
    %23 = arith.maximumf %17, %22 : vector<2x128xf32>
    %24 = arith.cmpf ogt, %5, %23 : vector<2x128xf32>
    %c127_i32 = arith.constant 127 : i32
    %25 = tpu.dynamic_rotate %5 by %c127_i32 dim 1 : vector<2x128xf32>, i32 -> vector<2x128xf32>
    %c127_i32_8 = arith.constant 127 : i32
    %26 = vector.broadcast %c127_i32_8 : i32 to vector<2x128xi32>
    %27 = arith.cmpi slt, %6, %26 : vector<2x128xi32>
    %cst_9 = arith.constant 0xFF800000 : f32
    %28 = vector.broadcast %cst_9 : f32 to vector<2x128xf32>
    %29 = arith.select %27, %25, %28 : vector<2x128xi1>, vector<2x128xf32>
    %c127_i32_10 = arith.constant 127 : i32
    %30 = tpu.dynamic_rotate %29 by %c127_i32_10 dim 1 : vector<2x128xf32>, i32 -> vector<2x128xf32>
    %c127_i32_11 = arith.constant 127 : i32
    %31 = vector.broadcast %c127_i32_11 : i32 to vector<2x128xi32>
    %32 = arith.cmpi slt, %6, %31 : vector<2x128xi32>
    %cst_12 = arith.constant 0xFF800000 : f32
    %33 = vector.broadcast %cst_12 : f32 to vector<2x128xf32>
    %34 = arith.select %32, %30, %33 : vector<2x128xi1>, vector<2x128xf32>
    %35 = arith.maximumf %29, %34 : vector<2x128xf32>
    %c126_i32 = arith.constant 126 : i32
    %36 = tpu.dynamic_rotate %35 by %c126_i32 dim 1 : vector<2x128xf32>, i32 -> vector<2x128xf32>
    %c126_i32_13 = arith.constant 126 : i32
    %37 = vector.broadcast %c126_i32_13 : i32 to vector<2x128xi32>
    %38 = arith.cmpi slt, %6, %37 : vector<2x128xi32>
    %cst_14 = arith.constant 0xFF800000 : f32
    %39 = vector.broadcast %cst_14 : f32 to vector<2x128xf32>
    %40 = arith.select %38, %36, %39 : vector<2x128xi1>, vector<2x128xf32>
    %41 = arith.maximumf %35, %40 : vector<2x128xf32>
    %42 = arith.cmpf oge, %5, %41 : vector<2x128xf32>
    %43 = arith.andi %24, %42 : vector<2x128xi1>
    %cst_15 = arith.constant 5.000000e-01 : f32
    %44 = vector.broadcast %cst_15 : f32 to vector<2x128xf32>
    %45 = arith.cmpf ogt, %5, %44 : vector<2x128xf32>
    %46 = arith.andi %45, %43 : vector<2x128xi1>
    %c0_16 = arith.constant 0 : index
    %c0_17 = arith.constant 0 : index
    %47 = vector.load %arg2[%c0_16, %c0_17] : memref<2x128xf32, #tpu.memory_space<vmem>>, vector<2x128xf32>
    tpu.vector_store %arg2[%c0_16, %c0_17], %5 {strides = array<i32>} : memref<2x128xf32, #tpu.memory_space<vmem>>, vector<2x128xf32>,
    %48 = arith.extui %46 : vector<2x128xi1> to vector<2x128xi8>
    %c0_18 = arith.constant 0 : index
    %c0_19 = arith.constant 0 : index
    %49 = vector.load %arg3[%c0_18, %c0_19] : memref<2x128xi8, #tpu.memory_space<vmem>>, vector<2x128xi8>
    tpu.vector_store %arg3[%c0_18, %c0_19], %48 {strides = array<i32>} : memref<2x128xi8, #tpu.memory_space<vmem>>, vector<2x128xi8>,
    return
  }
  func.func @transform_0(%arg0: i32) -> (i32, i32) {
    %c0_i32 = arith.constant 0 : i32
    %c0_i32_0 = arith.constant 0 : i32
    return %arg0, %c0_i32 : i32, i32
  }
  func.func @transform_1(%arg0: i32) -> (i32, i32) {
    %c0_i32 = arith.constant 0 : i32
    %c0_i32_0 = arith.constant 0 : i32
    return %arg0, %c0_i32 : i32, i32
  }
  func.func @transform_2(%arg0: i32) -> (i32, i32) {
    %c0_i32 = arith.constant 0 : i32
    %c0_i32_0 = arith.constant 0 : i32
    return %arg0, %c0_i32 : i32, i32
  }
}

</mosaic_0001>

<llo_original>
// kernel: tpu_custom_call.1
$region0: #{tpu_custom_call.1}
  #allocation0 [shape = 'u32[]', space=smem, size = 0x4, offset = 0x4, fixed_abs, tag = 'smem constant byte address 0x4 - core index']
  #allocation1 [shape = 'u32[144,128]{1,0:T(1,128)}', space=vmem, size = 0x12000, scoped, tag = 'internal scratch']
  %s0 = inlined_call_operand.hbm [shape: f32[2,128], index: 0, kind: input, shape index: {}]
  %s1 = inlined_call_operand.hbm [shape: f32[2,128], index: 1, kind: output, shape index: {0}]
  %s2 = inlined_call_operand.hbm [shape: s8[2,128], index: 2, kind: output, shape index: {1}]
  %3 = xla_tuple %s1, %s2
  %s4 = sld [smem:[#allocation0]]
  $region26: #{tpu_custom_call.1} parent=0
    _
  %s6 = ssub.s32 1, %s4
  %s7 = scalar_select 0, %s6, %s4
  $region1: #{tpu_custom_call.1} parent=0
    #allocation2 [shape = 'u8[1024]{0}', space=vmem, size = 0x400, scoped, tag = 'input window, operand 0, single buffered']
    #allocation3 [shape = 's32[1]{0}', space=sflag, size = 0x4, scoped, tag = 'scoped memory for tpu_custom_call.1']
    #allocation4 [shape = 's32[1]{0}', space=sflag, size = 0x4, scoped, tag = 'scoped memory for tpu_custom_call.1']
    #allocation5 [shape = 'u8[1024]{0}', space=vmem, size = 0x400, scoped, tag = 'output window, operand 0, single buffered']
    #allocation6 [shape = 'u8[512]{0}', space=vmem, size = 0x400, scoped, tag = 'output window, operand 1, single buffered']
    #allocation7 [shape = 's32[1]{0}', space=sflag, size = 0x4, scoped, tag = 'scoped memory for tpu_custom_call.1']
    %8 = vsyncpa [#allocation3], 0
    %9 = vsyncpa [#allocation4], 0
    %10 = vsyncpa [#allocation7], 0
    // Predicated region
    $region2: #{tpu_custom_call.1} parent=1 // pred_check
      _
    $region3: #{tpu_custom_call.1} parent=1 // pred_check_branch
      %12 = sbr.rel (0) target = $region5
    $region4: #{tpu_custom_call.1} parent=1 // pred_region
      %s14 = ssub.s32 32, 32
      %15 = vsyncadd [#allocation3], %s14
      %s17 = sshll.u32 [#allocation2], 4
      %s18 = int_to_ptr.vmem [resolvable:$true] %s17
      %20 = dma.hbm_to_vmem [thread:$0]  %s0, 32, %s18, [#allocation3]
    $region5: #{tpu_custom_call.1} parent=1 // pred_fallthru
      _
    // Predicated region
    $region6: #{tpu_custom_call.1} parent=1 // pred_check
      _
    $region7: #{tpu_custom_call.1} parent=1 // pred_check_branch
      %22 = sbr.rel (0) target = $region9
    $region8: #{tpu_custom_call.1} parent=1 // pred_region
      %23 = dma.done [#allocation3], 32
    $region9: #{tpu_custom_call.1} parent=1 // pred_fallthru
      _
    %v26 = vld [vmem:[#allocation2] sm:$0x3]
    %v27 = vxor.u32 %v26, 2147483648
    %v28 = vmul.f32 %v27, 1.442695
    %v29 = vpow.pop %v28
    %v30 = vadd.f32 %v29, 1.0
    %v31 = vrcp.pop %v30
    %v32 = vmul.f32 1.0, %v31
    %v33 = vlaneseq
    %v34 = vand.u32 %v33, 127
    %35 = vrot.lane.b32.xlu0 %v32, 1
    %v36 = vpop.permute.xlu0 %35
    %vm37 = vcmp.ge.s32.totalorder %v34, 1
    %v38 = vsel %vm37, %v36, -inf
    %39 = vrot.lane.b32.xlu0 %v38, 1
    %v40 = vpop.permute.xlu0 %39
    %v41 = vsel %vm37, %v40, -inf
    %v42 = vmax.f32 %v38, %v41
    %43 = vrot.lane.b32.xlu0 %v42, 2
    %v44 = vpop.permute.xlu0 %43
    %vm45 = vcmp.ge.s32.totalorder %v34, 2
    %v46 = vsel %vm45, %v44, -inf
    %v47 = vmax.f32 %v42, %v46
    %vm48 = vcmp.gt.f32.partialorder %v32, %v47
    %49 = vrot.lane.b32.xlu0 %v32, 127
    %v50 = vpop.permute.xlu0 %49
    %vm51 = vcmp.lt.s32.totalorder %v34, 127
    %v52 = vsel %vm51, %v50, -inf
    %53 = vrot.lane.b32.xlu0 %v52, 127
    %v54 = vpop.permute.xlu0 %53
    %v55 = vsel %vm51, %v54, -inf
    %v56 = vmax.f32 %v52, %v55
    %57 = vrot.lane.b32.xlu0 %v56, 126
    %v58 = vpop.permute.xlu0 %57
    %vm59 = vcmp.lt.s32.totalorder %v34, 126
    %v60 = vsel %vm59, %v58, -inf
    %v61 = vmax.f32 %v56, %v60
    %vm62 = vcmp.ge.f32.partialorder %v32, %v61
    %vm63 = vmand %vm48, %vm62
    %vm64 = vcmp.gt.f32.partialorder %v32, 0.5
    %vm65 = vmand %vm64, %vm63
    %66 = vst [vmem:[#allocation5] sm:$0x3] %v32
    %vm67 = vmpackc.low %vm65, %vm65
    %vm68 = vmpackc.even %vm67, %vm67
    %v69 = vsel %vm68, 16843009, 0
    %vm70 = vcmask 1040384
    %vm71 = vsmask.f32 256
    %vm72 = vmand %vm70, %vm71
    %v73 = vld [vmem:[#allocation6] sm:$0x1]
    %v74 = vsel %vm72, %v69, %v73
    %75 = vst [vmem:[#allocation6] sm:$0x1] %v74
    // Predicated region
    $region10: #{tpu_custom_call.1} parent=1 // pred_check
      _
    $region11: #{tpu_custom_call.1} parent=1 // pred_check_branch
      %77 = sbr.rel (0) target = $region13
    $region12: #{tpu_custom_call.1} parent=1 // pred_region
      %s79 = ssub.s32 32, 32
      %80 = vsyncadd [#allocation4], %s79
      %s82 = sshll.u32 [#allocation5], 4
      %s83 = int_to_ptr.vmem [resolvable:$true] %s82
      %85 = dma.vmem_to_hbm [thread:$0]  %s83, 32, %s1, [#allocation4]
    $region13: #{tpu_custom_call.1} parent=1 // pred_fallthru
      _
    // Predicated region
    $region14: #{tpu_custom_call.1} parent=1 // pred_check
      _
    $region15: #{tpu_custom_call.1} parent=1 // pred_check_branch
      %87 = sbr.rel (0) target = $region17
    $region16: #{tpu_custom_call.1} parent=1 // pred_region
      %s89 = ssub.s32 16, 16
      %90 = vsyncadd [#allocation7], %s89
      %s92 = sshll.u32 [#allocation6], 4
      %s93 = int_to_ptr.vmem [resolvable:$true] %s92
      %95 = dma.vmem_to_hbm [thread:$0]  %s93, 16, %s2, [#allocation7]
    $region17: #{tpu_custom_call.1} parent=1 // pred_fallthru
      _
    // Predicated region
    $region18: #{tpu_custom_call.1} parent=1 // pred_check
      _
    $region19: #{tpu_custom_call.1} parent=1 // pred_check_branch
      %97 = sbr.rel (0) target = $region21
    $region20: #{tpu_custom_call.1} parent=1 // pred_region
      %98 = dma.done [#allocation4], 32
    $region21: #{tpu_custom_call.1} parent=1 // pred_fallthru
      _
    // Predicated region
    $region22: #{tpu_custom_call.1} parent=1 // pred_check
      _
    $region23: #{tpu_custom_call.1} parent=1 // pred_check_branch
      %100 = sbr.rel (0) target = $region25
    $region24: #{tpu_custom_call.1} parent=1 // pred_region
      %101 = dma.done [#allocation7], 16
    $region25: #{tpu_custom_call.1} parent=1 // pred_fallthru
      _
    %102 = vsyncpa [#allocation3], 1
    %103 = vsyncpa [#allocation4], 1
    %104 = vsyncpa [#allocation7], 1

</llo_original>
